<compile_context>
chip_gen: v7x
topology: tpu7x:2x2x1
jax: 0.10.0
libtpu: 0.0.40
codegen_flags: <defaults>
</compile_context>

<pallas_src>
import jax
import jax.numpy as jnp
from jax.experimental import pallas as pl
from jax.experimental.pallas import tpu as pltpu


def _round_up(x, m):
    return (x + m - 1) // m * m


def _vmem_capacity_bytes():
    try:
        return int(pltpu.get_tpu_info().vmem_capacity_bytes)
    except Exception:
        return 64 << 20          # conservative fallback (v7x per-TC VMEM)


def _kernel_vmem_bytes(tile, n_p, p, itemsize, d, h_dim, fuse_w1,
                       rhs_resident, adj_bufs):
    """Rough VMEM footprint of all kernel buffers (double/triple buffered)."""
    adj = adj_bufs * tile * tile * itemsize
    rhs = (2 * n_p * p if rhs_resident else 2 * tile * p) * itemsize
    acc = tile * p * 4
    w1 = 2 * d * h_dim * 4 if fuse_w1 else 0
    vecs = 2 * 2 * h_dim * 4                      # b1, w2 rows (f32)
    out = 2 * tile * 4
    return adj + rhs + acc + w1 + vecs + out


def _choose_tile(n, max_tile, itemsize, p, budget, d, h_dim, fuse_w1):
    """Pick the adj tile: exact-fit single tile or a 128..2048 power-of-two,
    minimizing (adj HBM bytes / est. BW + 0.35us per grid step) within the
    VMEM budget.  >=2 row tiles get a 2x BW credit (v7x megacore split)."""
    t_exact = _round_up(max(n, 8), 8)
    cands = []
    if t_exact <= max_tile:
        cands.append(t_exact)                     # zero-padding single tile
    cands += [t for t in (128, 256, 512, 1024, 2048)
              if t <= max_tile and t < t_exact]
    if not cands:
        cands = [min(t_exact, max(_round_up(max_tile, 8), 8))]

    feasible = [t for t in cands
                if _kernel_vmem_bytes(t, _round_up(n, t), p, itemsize, d,
                                      h_dim, fuse_w1, False, 3) <= budget]
    if not feasible:
        feasible = [min(cands)]

    def cost(t):
        n_p = _round_up(n, t)
        rows = n_p // t
        steps = rows * rows
        bw = 1.0e12 * (2.0 if rows >= 2 else 1.0)
        return n_p * n_p * itemsize / bw + steps * 0.35e-6

    min_c = min(cost(t) for t in feasible)
    tile = max(t for t in feasible if cost(t) <= 1.05 * min_c)
    return tile, _round_up(n, tile)


def _make_kernel(tile, fuse_w1, rhs_resident):
    def kernel(adj_ref, rhs_ref, *rest):
        if fuse_w1:
            w1_ref, b1_ref, w2_ref, b2_ref, out_ref, acc_ref = rest
        else:
            w1_ref = None
            b1_ref, w2_ref, b2_ref, out_ref, acc_ref = rest

        k = pl.program_id(1)

        @pl.when(k == 0)
        def _init():
            acc_ref[...] = jnp.zeros_like(acc_ref)

        if rhs_resident:
            start = pl.multiple_of(k * tile, tile)
            rhs_blk = rhs_ref[pl.ds(start, tile), :]
        else:
            rhs_blk = rhs_ref[...]

        # O(N^2) aggregation contracted over P = min(D, H); f32 accumulation.
        acc_ref[...] += jnp.dot(adj_ref[...], rhs_blk,
                                preferred_element_type=jnp.float32)

        @pl.when(k == pl.num_programs(1) - 1)
        def _epilogue():
            acc = acc_ref[...]                                   # (tile, P) f32
            if w1_ref is not None:
                # fc1 applied after aggregation (D <= H case); f32 x f32.
                h = jnp.dot(acc, w1_ref[...],
                            preferred_element_type=jnp.float32)
            else:
                h = acc
            h = jnp.maximum(h + b1_ref[...], 0.0)                # bias + ReLU
            # Dropout(p=0.3) is the identity in eval mode.
            # fc2 as a contraction with w2, producing a lane-dense (1, tile) row.
            o_row = jax.lax.dot_general(
                w2_ref[...], h,
                dimension_numbers=(((1,), (1,)), ((), ())),
                preferred_element_type=jnp.float32)              # (1, tile)
            o_row = o_row + b2_ref[0, 0]
            out_ref[...] = o_row[None].astype(out_ref.dtype)

    return kernel


def simple_gnn_forward(features, adj, w1, b1, w2, b2, *,
                       compute_dtype=jnp.bfloat16, max_tile=2048):
    """features: (N, D), adj: (N, N), w1: (D, H), b1: (H,), w2: (H,), b2: ().

    Returns (N,) float32.
    """
    n, d = features.shape
    h_dim = w1.shape[1]
    itemsize = jnp.dtype(compute_dtype).itemsize

    # Static associativity: always contract the N^2 matmul over P = min(D, H).
    fuse_w1 = d <= h_dim
    if fuse_w1:
        rhs = features                                           # (N, D)
        p = d
    else:
        rhs = features.astype(jnp.float32) @ w1.astype(jnp.float32)  # (N, H)
        p = h_dim

    # Generation-aware VMEM budget / scoped limit.
    cap = _vmem_capacity_bytes()                  # 128 MiB v5e/v6e, 64 MiB v7x
    limit_cap = min(cap * 3 // 4, 100 << 20)
    budget = limit_cap - (2 << 20)

    tile, n_p = _choose_tile(n, max_tile, itemsize, p, budget, d, h_dim, fuse_w1)
    rows = n_p // tile
    kt = n_p // tile
    steps = rows * kt

    adj_bufs = 3 if steps >= 3 else 2
    rhs_resident = _kernel_vmem_bytes(tile, n_p, p, itemsize, d, h_dim,
                                      fuse_w1, True, adj_bufs) <= budget
    needed = _kernel_vmem_bytes(tile, n_p, p, itemsize, d, h_dim, fuse_w1,
                                rhs_resident, adj_bufs)
    vmem_limit = int(min(limit_cap, max(needed + (8 << 20), 32 << 20)))

    # Cast to the compute dtype FIRST; pad only if needed (zero rows/cols of
    # adj and zero rows of rhs contribute nothing to valid outputs).
    adj_c = adj.astype(compute_dtype)
    rhs_c = rhs.astype(compute_dtype)
    if n_p != n:
        adj_c = jnp.pad(adj_c, ((0, n_p - n), (0, n_p - n)))
        rhs_c = jnp.pad(rhs_c, ((0, n_p - n), (0, 0)))

    b1_r = jnp.asarray(b1, jnp.float32).reshape(1, h_dim)
    w2_r = jnp.asarray(w2, jnp.float32).reshape(1, h_dim)
    b2_r = jnp.asarray(b2, jnp.float32).reshape(1, 1)

    # adj BlockSpec (optionally 3-deep pipelined to hide boundary bubbles).
    adj_idx = lambda i, k: (i, k)
    adj_spec = pl.BlockSpec((tile, tile), adj_idx)
    if adj_bufs > 2:
        try:
            adj_spec = pl.BlockSpec((tile, tile), adj_idx,
                                    pipeline_mode=pl.Buffered(adj_bufs))
        except TypeError:
            adj_spec = pl.BlockSpec((tile, tile), adj_idx)

    if rhs_resident:
        rhs_spec = pl.BlockSpec((n_p, p), lambda i, k: (0, 0))   # VMEM-resident
    else:
        rhs_spec = pl.BlockSpec((tile, p), lambda i, k: (k, 0))  # streamed per-k

    in_specs = [adj_spec, rhs_spec]
    operands = [adj_c, rhs_c]
    if fuse_w1:
        in_specs.append(pl.BlockSpec((d, h_dim), lambda i, k: (0, 0)))   # W1 f32
        operands.append(w1.astype(jnp.float32))
    in_specs += [
        pl.BlockSpec((1, h_dim), lambda i, k: (0, 0)),           # b1 (f32)
        pl.BlockSpec((1, h_dim), lambda i, k: (0, 0)),           # w2 row (f32)
        pl.BlockSpec(memory_space=pltpu.MemorySpace.SMEM),       # b2 scalar
    ]
    operands += [b1_r, w2_r, b2_r]

    # Lane-dense output: row tile i writes its tile values to out[i, 0, :].
    out_spec = pl.BlockSpec((1, 1, tile), lambda i, k: (i, 0, 0))

    flops = (2 * n_p * n_p * p
             + (2 * n_p * d * h_dim if fuse_w1 else 0)
             + 4 * n_p * h_dim)
    bytes_accessed = (n_p * n_p * itemsize
                      + (n_p * p if rhs_resident else rows * n_p * p) * itemsize
                      + n_p * 4
                      + (d * h_dim * 4 if fuse_w1 else 0)
                      + (2 * h_dim + 1) * 4)

    out = pl.pallas_call(
        _make_kernel(tile, fuse_w1, rhs_resident),
        out_shape=jax.ShapeDtypeStruct((rows, 1, tile), jnp.float32),
        grid_spec=pltpu.PrefetchScalarGridSpec(
            num_scalar_prefetch=0,
            grid=(rows, kt),                       # (row tiles, K tiles); K last
            in_specs=in_specs,
            out_specs=out_spec,
            scratch_shapes=[pltpu.VMEM((tile, p), jnp.float32)],
        ),
        compiler_params=pltpu.CompilerParams(
            dimension_semantics=("parallel", "arbitrary"),
            vmem_limit_bytes=vmem_limit,
        ),
        cost_estimate=pl.CostEstimate(
            flops=flops, transcendentals=0, bytes_accessed=bytes_accessed),
    )(*operands)

    return out.reshape(n_p)[:n]                    # == x.squeeze()


def gnn_reference(features, adj, w1, b1, w2, b2):
    """Pure-JAX f32 reference of the same forward pass."""
    x = adj @ features
    h = jnp.maximum(x @ w1 + b1[None, :], 0.0)
    return h @ w2 + b2


def init_params(key, input_dim, hidden_dim):
    """Deterministic init mimicking nn.Linear's uniform(-1/sqrt(fan_in), +)."""
    k1, k2, k3, k4 = jax.random.split(key, 4)
    bound1 = 1.0 / (input_dim ** 0.5)
    bound2 = 1.0 / (hidden_dim ** 0.5)
    # w1 stored as (in_features, out_features) == W.T relative to PyTorch.
    w1 = jax.random.uniform(k1, (input_dim, hidden_dim), jnp.float32, -bound1, bound1)
    b1 = jax.random.uniform(k2, (hidden_dim,), jnp.float32, -bound1, bound1)
    w2 = jax.random.uniform(k3, (hidden_dim,), jnp.float32, -bound2, bound2)
    b2 = jax.random.uniform(k4, (), jnp.float32, -bound2, bound2)
    return w1, b1, w2, b2


if __name__ == "__main__":
    # Small shapes: N=8 graph nodes (sentences), input_dim=16, hidden_dim=32.
    N, INPUT_DIM, HIDDEN_DIM = 8, 16, 32

    key = jax.random.PRNGKey(0)
    k_feat, k_adj, k_par, k_feat2, k_par2, k_feat3, k_adj3 = jax.random.split(key, 7)

    def make_graph(k_f, k_a, n, d):
        feats = jax.random.normal(k_f, (n, d), jnp.float32)
        a = jax.random.uniform(k_a, (n, n), jnp.float32)
        adj = (a + a.T) * 0.5 + jnp.eye(n, dtype=jnp.float32)
        adj = adj / jnp.sum(adj, axis=1, keepdims=True)   # row-normalized + self-loops
        return feats, adj

    features, adj = make_graph(k_feat, k_adj, N, INPUT_DIM)
    w1, b1, w2, b2 = init_params(k_par, INPUT_DIM, HIDDEN_DIM)
    ref = gnn_reference(features, adj, w1, b1, w2, b2)

    # 1) f32 compute path (D <= H: W1 fused in the kernel epilogue).
    out_f32 = jax.block_until_ready(
        simple_gnn_forward(features, adj, w1, b1, w2, b2,
                           compute_dtype=jnp.float32))
    assert out_f32.shape == (N,)
    assert jnp.allclose(out_f32, ref, atol=5e-3, rtol=5e-3)

    # 2) Default bf16-MXU / f32-accumulate path (v5e/v6e/v7x friendly).
    out_bf16 = jax.block_until_ready(
        simple_gnn_forward(features, adj, w1, b1, w2, b2))
    assert out_bf16.shape == (N,)
    assert jnp.allclose(out_bf16, ref, atol=5e-2, rtol=5e-2)

    # 3) D > H config exercises the pre-projection (adj @ (feat @ W1)) path.
    D2, H2 = 48, 16
    features2 = jax.random.normal(k_feat2, (N, D2), jnp.float32)
    w1b, b1b, w2b, b2b = init_params(k_par2, D2, H2)
    ref2 = gnn_reference(features2, adj, w1b, b1b, w2b, b2b)
    out2 = jax.block_until_ready(
        simple_gnn_forward(features2, adj, w1b, b1b, w2b, b2b,
                           compute_dtype=jnp.float32))
    assert out2.shape == (N,)
    assert jnp.allclose(out2, ref2, atol=5e-3, rtol=5e-3)

    # 4) Multi-tile grid + padded tail + resident-rhs pl.ds slicing path
    #    (max_tile=128 forces a 3x3 grid at N=300 -> n_p=384).
    N3 = 300
    features3, adj3 = make_graph(k_feat3, k_adj3, N3, INPUT_DIM)
    ref3 = gnn_reference(features3, adj3, w1, b1, w2, b2)
    out3 = jax.block_until_ready(
        simple_gnn_forward(features3, adj3, w1, b1, w2, b2,
                           compute_dtype=jnp.float32, max_tile=128))
    assert out3.shape == (N3,)
    assert jnp.allclose(out3, ref3, atol=5e-3, rtol=5e-3)

    print("KERNEL_OK")
</pallas_src>

<mosaic_0001>
module attributes {stable_mosaic.version = 11 : i64} {
  func.func @kernel(%arg0: i32, %arg1: i32, %arg2: memref<8x8xf32, #tpu.memory_space<vmem>>, %arg3: memref<8x16xf32, #tpu.memory_space<vmem>>, %arg4: memref<16x32xf32, #tpu.memory_space<vmem>>, %arg5: memref<1x32xf32, #tpu.memory_space<vmem>>, %arg6: memref<1x32xf32, #tpu.memory_space<vmem>>, %arg7: memref<1x1xf32, #tpu.memory_space<smem>>, %arg8: memref<1x1x8xf32, #tpu.memory_space<vmem>>, %arg9: memref<8x16xf32, #tpu.memory_space<vmem>>) attributes {dimension_semantics = [#tpu.dimension_semantics<parallel>, #tpu.dimension_semantics<arbitrary>], iteration_bounds = array<i64: 1, 1>, scalar_prefetch = 0 : i64, scratch_operands = 1 : i64, tpu.core_type = #tpu.core_type<tc>, window_params = [{transform_indices = @transform_0, window_bounds = array<i64: 8, 8>}, {pipeline_mode = #tpu.pipeline_mode<synchronous>, transform_indices = @transform_1, window_bounds = array<i64: 8, 16>}, {pipeline_mode = #tpu.pipeline_mode<synchronous>, transform_indices = @transform_2, window_bounds = array<i64: 16, 32>}, {pipeline_mode = #tpu.pipeline_mode<synchronous>, transform_indices = @transform_3, window_bounds = array<i64: 1, 32>}, {pipeline_mode = #tpu.pipeline_mode<synchronous>, transform_indices = @transform_4, window_bounds = array<i64: 1, 32>}, {transform_indices = @transform_5, window_bounds = array<i64: 1, 1>}, {transform_indices = @transform_6, window_bounds = array<i64: 1, 1, 8>}]} {
    %c0_i32 = arith.constant 0 : i32
    %0 = arith.cmpi eq, %arg1, %c0_i32 : i32
    %1 = arith.extui %0 : i1 to i32
    %c0_i32_0 = arith.constant 0 : i32
    %2 = arith.cmpi ne, %1, %c0_i32_0 : i32
    scf.if %2 {
      %cst_9 = arith.constant 0.000000e+00 : f32
      %15 = vector.broadcast %cst_9 : f32 to vector<8x16xf32>
      %c0_10 = arith.constant 0 : index
      %c0_11 = arith.constant 0 : index
      %16 = vector.load %arg9[%c0_10, %c0_11] : memref<8x16xf32, #tpu.memory_space<vmem>>, vector<8x16xf32>
      tpu.vector_store %arg9[%c0_10, %c0_11], %15 {strides = array<i32>} : memref<8x16xf32, #tpu.memory_space<vmem>>, vector<8x16xf32>,
    } else {
    }
    %c8_i32 = arith.constant 8 : i32
    %3 = arith.muli %arg1, %c8_i32 : i32
    %4 = tpu.assume_multiple %3, 8 : i32
    %5 = arith.index_cast %4 : i32 to index
    %c0 = arith.constant 0 : index
    %6 = vector.load %arg3[%5, %c0] : memref<8x16xf32, #tpu.memory_space<vmem>>, vector<8x16xf32>
    %c0_1 = arith.constant 0 : index
    %c0_2 = arith.constant 0 : index
    %7 = vector.load %arg9[%c0_1, %c0_2] : memref<8x16xf32, #tpu.memory_space<vmem>>, vector<8x16xf32>
    %c0_3 = arith.constant 0 : index
    %c0_4 = arith.constant 0 : index
    %8 = vector.load %arg2[%c0_3, %c0_4] : memref<8x8xf32, #tpu.memory_space<vmem>>, vector<8x8xf32>
    %cst = arith.constant dense<0.000000e+00> : vector<8x16xf32>
    %9 = tpu.matmul %8, %6, %cst {dimension_numbers = #tpu.dot_dimension_numbers<[1], [0], [0], [1], [0, 0, 1, 1], [], []>} : vector<8x8xf32>, vector<8x16xf32>, vector<8x16xf32> -> vector<8x16xf32>
    %10 = arith.addf %7, %9 : vector<8x16xf32>
    %c0_5 = arith.constant 0 : index
    %c0_6 = arith.constant 0 : index
    %11 = vector.load %arg9[%c0_5, %c0_6] : memref<8x16xf32, #tpu.memory_space<vmem>>, vector<8x16xf32>
    tpu.vector_store %arg9[%c0_5, %c0_6], %10 {strides = array<i32>} : memref<8x16xf32, #tpu.memory_space<vmem>>, vector<8x16xf32>,
    %c0_i32_7 = arith.constant 0 : i32
    %12 = arith.cmpi eq, %arg1, %c0_i32_7 : i32
    %13 = arith.extui %12 : i1 to i32
    %c0_i32_8 = arith.constant 0 : i32
    %14 = arith.cmpi ne, %13, %c0_i32_8 : i32
    scf.if %14 {
      %c0_9 = arith.constant 0 : index
      %c0_10 = arith.constant 0 : index
      %15 = vector.load %arg9[%c0_9, %c0_10] : memref<8x16xf32, #tpu.memory_space<vmem>>, vector<8x16xf32>
      %c0_11 = arith.constant 0 : index
      %c0_12 = arith.constant 0 : index
      %16 = vector.load %arg4[%c0_11, %c0_12] : memref<16x32xf32, #tpu.memory_space<vmem>>, vector<16x32xf32>
      %cst_13 = arith.constant dense<0.000000e+00> : vector<8x32xf32>
      %17 = tpu.matmul %15, %16, %cst_13 {dimension_numbers = #tpu.dot_dimension_numbers<[1], [0], [0], [1], [0, 0, 1, 1], [], []>} : vector<8x16xf32>, vector<16x32xf32>, vector<8x32xf32> -> vector<8x32xf32>
      %c0_14 = arith.constant 0 : index
      %c0_15 = arith.constant 0 : index
      %18 = vector.load %arg5[%c0_14, %c0_15] : memref<1x32xf32, #tpu.memory_space<vmem>>, vector<1x32xf32>
      %19 = vector.broadcast %18 : vector<1x32xf32> to vector<8x32xf32>
      %20 = arith.addf %17, %19 : vector<8x32xf32>
      %cst_16 = arith.constant 0.000000e+00 : f32
      %21 = vector.broadcast %cst_16 : f32 to vector<8x32xf32>
      %22 = arith.maximumf %20, %21 : vector<8x32xf32>
      %c0_17 = arith.constant 0 : index
      %c0_18 = arith.constant 0 : index
      %23 = vector.load %arg6[%c0_17, %c0_18] : memref<1x32xf32, #tpu.memory_space<vmem>>, vector<1x32xf32>
      %cst_19 = arith.constant dense<0.000000e+00> : vector<1x8xf32>
      %24 = tpu.matmul %23, %22, %cst_19 {dimension_numbers = #tpu.dot_dimension_numbers<[1], [1], [0], [0], [0, 0, 1, 0], [], []>} : vector<1x32xf32>, vector<8x32xf32>, vector<1x8xf32> -> vector<1x8xf32>
      %c0_20 = arith.constant 0 : index
      %c0_21 = arith.constant 0 : index
      %25 = memref.load %arg7[%c0_20, %c0_21] : memref<1x1xf32, #tpu.memory_space<smem>>
      %26 = vector.broadcast %25 : f32 to vector<1x8xf32>
      %27 = arith.addf %24, %26 : vector<1x8xf32>
      %28 = vector.shape_cast %27 : vector<1x8xf32> to vector<1x1x8xf32>
      %c0_22 = arith.constant 0 : index
      %c0_23 = arith.constant 0 : index
      %c0_24 = arith.constant 0 : index
      %29 = vector.load %arg8[%c0_22, %c0_23, %c0_24] : memref<1x1x8xf32, #tpu.memory_space<vmem>>, vector<1x1x8xf32>
      tpu.vector_store %arg8[%c0_22, %c0_23, %c0_24], %28 {strides = array<i32>} : memref<1x1x8xf32, #tpu.memory_space<vmem>>, vector<1x1x8xf32>,
    } else {
    }
    return
  }
  func.func @transform_0(%arg0: i32, %arg1: i32) -> (i32, i32) {
    %c0_i32 = arith.constant 0 : i32
    return %arg0, %arg1 : i32, i32
  }
  func.func @transform_1(%arg0: i32, %arg1: i32) -> (i32, i32) {
    %c0_i32 = arith.constant 0 : i32
    %c0_i32_0 = arith.constant 0 : i32
    %c0_i32_1 = arith.constant 0 : i32
    return %c0_i32, %c0_i32_0 : i32, i32
  }
  func.func @transform_2(%arg0: i32, %arg1: i32) -> (i32, i32) {
    %c0_i32 = arith.constant 0 : i32
    %c0_i32_0 = arith.constant 0 : i32
    %c0_i32_1 = arith.constant 0 : i32
    return %c0_i32, %c0_i32_0 : i32, i32
  }
  func.func @transform_3(%arg0: i32, %arg1: i32) -> (i32, i32) {
    %c0_i32 = arith.constant 0 : i32
    %c0_i32_0 = arith.constant 0 : i32
    %c0_i32_1 = arith.constant 0 : i32
    return %c0_i32, %c0_i32_0 : i32, i32
  }
  func.func @transform_4(%arg0: i32, %arg1: i32) -> (i32, i32) {
    %c0_i32 = arith.constant 0 : i32
    %c0_i32_0 = arith.constant 0 : i32
    %c0_i32_1 = arith.constant 0 : i32
    return %c0_i32, %c0_i32_0 : i32, i32
  }
  func.func @transform_5(%arg0: i32, %arg1: i32) -> (i32, i32) {
    %c0_i32 = arith.constant 0 : i32
    %c0_i32_0 = arith.constant 0 : i32
    %c0_i32_1 = arith.constant 0 : i32
    return %c0_i32, %c0_i32_0 : i32, i32
  }
  func.func @transform_6(%arg0: i32, %arg1: i32) -> (i32, i32, i32) {
    %c0_i32 = arith.constant 0 : i32
    %c0_i32_0 = arith.constant 0 : i32
    %c0_i32_1 = arith.constant 0 : i32
    return %arg0, %c0_i32, %c0_i32_0 : i32, i32, i32
  }
}

</mosaic_0001>

<llo_original>
// kernel: tpu_custom_call.1
$region0: #{tpu_custom_call.1}
  #allocation0 [shape = 'u32[]', space=smem, size = 0x4, offset = 0x4, fixed_abs, tag = 'smem constant byte address 0x4 - core index']
  #allocation1 [shape = 'u32[144,128]{1,0:T(1,128)}', space=vmem, size = 0x12000, scoped, tag = 'internal scratch']
  #allocation2 [shape = 'f32[8,16]{1,0:T(8,128)}', space=vmem, size = 0x1000, scoped, tag = 'scratch operand']
  #allocation3 [shape = 'f32[1,1]{1,0:T(1,128)S(6)}', space=smem, size = 0x200, scoped, tag = 'scoped memory for tpu_custom_call.1']
  %s0 = inlined_call_operand.hbm [shape: f32[8,8], index: 0, kind: input, shape index: {}]
  %s1 = inlined_call_operand.hbm [shape: f32[8,16], index: 1, kind: input, shape index: {}]
  %s2 = inlined_call_operand.hbm [shape: f32[16,32], index: 2, kind: input, shape index: {}]
  %s3 = inlined_call_operand.vmem [shape: f32[1,32], index: 3, kind: input, shape index: {}]
  %s4 = inlined_call_operand.vmem [shape: f32[1,32], index: 4, kind: input, shape index: {}]
  %s5 = inlined_call_operand.<no memory space> [shape: f32[1,1], index: 5, kind: input, shape index: {}]
  %s6 = inlined_call_operand.hbm [shape: f32[1,1,8], index: 6, kind: output, shape index: {}]
  %s7 = sld [smem:[#allocation0]]
  $region54: #{tpu_custom_call.1} parent=0
    _
  %s9 = ssub.s32 1, %s7
  %s10 = scalar_select 0, %s9, %s7
  %11 = sst [smem:[#allocation3]] %s5
  $region1: #{tpu_custom_call.1} parent=0
    #allocation4 [shape = 'u8[4096]{0}', space=vmem, size = 0x1000, scoped, tag = 'input window, operand 0, single buffered']
    #allocation5 [shape = 's32[1]{0}', space=sflag, size = 0x4, scoped, tag = 'scoped memory for tpu_custom_call.1']
    #allocation6 [shape = 's32[1]{0}', space=sflag, size = 0x4, scoped, tag = 'scoped memory for tpu_custom_call.1']
    #allocation7 [shape = 'u8[4096]{0}', space=vmem, size = 0x1000, scoped, tag = 'input window, operand 1, single buffered']
    #allocation8 [shape = 's32[1]{0}', space=sflag, size = 0x4, scoped, tag = 'scoped memory for tpu_custom_call.1']
    #allocation9 [shape = 'u8[8192]{0}', space=vmem, size = 0x2000, scoped, tag = 'input window, operand 2, single buffered']
    #allocation10 [shape = 'u8[512]{0}', space=vmem, size = 0x400, scoped, tag = 'output window, operand 0, single buffered']
    %12 = vsyncpa [#allocation5], 0
    %13 = vsyncpa [#allocation8], 0
    %14 = vsyncpa [#allocation6], 0
    // Predicated region
    $region2: #{tpu_custom_call.1} parent=1 // pred_check
      _
    $region3: #{tpu_custom_call.1} parent=1 // pred_check_branch
      %16 = sbr.rel (0) target = $region5
    $region4: #{tpu_custom_call.1} parent=1 // pred_region
      %s18 = ssub.s32 128, 128
      %19 = vsyncadd [#allocation5], %s18
      %s21 = sshll.u32 [#allocation4], 4
      %s22 = int_to_ptr.vmem [resolvable:$true] %s21
      %24 = dma.hbm_to_vmem [thread:$0]  %s0, 128, %s22, [#allocation5]
    $region5: #{tpu_custom_call.1} parent=1 // pred_fallthru
      _
    // Predicated region
    $region6: #{tpu_custom_call.1} parent=1 // pred_check
      _
    $region7: #{tpu_custom_call.1} parent=1 // pred_check_branch
      %26 = sbr.rel (0) target = $region9
    $region8: #{tpu_custom_call.1} parent=1 // pred_region
      %s28 = ssub.s32 128, 128
      %29 = vsyncadd [#allocation8], %s28
      %s31 = sshll.u32 [#allocation7], 4
      %s32 = int_to_ptr.vmem [resolvable:$true] %s31
      %34 = dma.hbm_to_vmem [thread:$0]  %s1, 128, %s32, [#allocation8]
    $region9: #{tpu_custom_call.1} parent=1 // pred_fallthru
      _
    // Predicated region
    $region10: #{tpu_custom_call.1} parent=1 // pred_check
      _
    $region11: #{tpu_custom_call.1} parent=1 // pred_check_branch
      %36 = sbr.rel (0) target = $region13
    $region12: #{tpu_custom_call.1} parent=1 // pred_region
      %s38 = ssub.s32 256, 256
      %39 = vsyncadd [#allocation8], %s38
      %s40 = sshll.u32 [#allocation9], 4
      %s41 = int_to_ptr.vmem [resolvable:$true] %s40
      %46 = dma.hbm_to_vmem [thread:$0]  %s2, 256, %s41, [#allocation8], 128, 128, 8
    $region13: #{tpu_custom_call.1} parent=1 // pred_fallthru
      _
    // Predicated region
    $region14: #{tpu_custom_call.1} parent=1 // pred_check
      _
    $region15: #{tpu_custom_call.1} parent=1 // pred_check_branch
      %48 = sbr.rel (0) target = $region17
    $region16: #{tpu_custom_call.1} parent=1 // pred_region
      _
    $region17: #{tpu_custom_call.1} parent=1 // pred_fallthru
      _
    // Predicated region
    $region18: #{tpu_custom_call.1} parent=1 // pred_check
      _
    $region19: #{tpu_custom_call.1} parent=1 // pred_check_branch
      %50 = sbr.rel (0) target = $region21
    $region20: #{tpu_custom_call.1} parent=1 // pred_region
      _
    $region21: #{tpu_custom_call.1} parent=1 // pred_fallthru
      _
    // Predicated region
    $region22: #{tpu_custom_call.1} parent=1 // pred_check
      _
    $region23: #{tpu_custom_call.1} parent=1 // pred_check_branch
      %52 = sbr.rel (0) target = $region25
    $region24: #{tpu_custom_call.1} parent=1 // pred_region
      _
    $region25: #{tpu_custom_call.1} parent=1 // pred_fallthru
      _
    // Predicated region
    $region26: #{tpu_custom_call.1} parent=1 // pred_check
      _
    $region27: #{tpu_custom_call.1} parent=1 // pred_check_branch
      %54 = sbr.rel (0) target = $region29
    $region28: #{tpu_custom_call.1} parent=1 // pred_region
      %55 = dma.done [#allocation5], 128
    $region29: #{tpu_custom_call.1} parent=1 // pred_fallthru
      _
    // Predicated region
    $region30: #{tpu_custom_call.1} parent=1 // pred_check
      _
    $region31: #{tpu_custom_call.1} parent=1 // pred_check_branch
      %57 = sbr.rel (0) target = $region33
    $region32: #{tpu_custom_call.1} parent=1 // pred_region
      %58 = dma.done [#allocation8], 128
    $region33: #{tpu_custom_call.1} parent=1 // pred_fallthru
      _
    // Predicated region
    $region34: #{tpu_custom_call.1} parent=1 // pred_check
      _
    $region35: #{tpu_custom_call.1} parent=1 // pred_check_branch
      %60 = sbr.rel (0) target = $region37
    $region36: #{tpu_custom_call.1} parent=1 // pred_region
      %61 = dma.done [#allocation8], 256
    $region37: #{tpu_custom_call.1} parent=1 // pred_fallthru
      _
    %p62 = scmp.eq.s32.totalorder 0, 0
    // Predicated region
    $region38: #{tpu_custom_call.1} parent=1 // pred_check
      %p63 = pneg %p62
    $region39: #{tpu_custom_call.1} parent=1 // pred_check_branch
      %65 = sbr.rel (%p63) target = $region41
    $region40: #{tpu_custom_call.1} parent=1 // pred_region
      %vm66 = vcmask 130048
      %67 = vst.msk [vmem:[#allocation2] sm:$0xff] %vm66, 0.0
    $region41: #{tpu_custom_call.1} parent=1 // pred_fallthru
      _
    %s68 = smul.u32 0, 8
    %s69 = scalar_lea.vmem [#allocation7], %s68
    %v70 = vld [vmem:[%s69] sm:$0xff]
    %v71 = vld [vmem:[#allocation2] sm:$0xff]
    %v72 = vld [vmem:[#allocation4] sm:$0xff]
    %vm73 = vcmask 64512
    %v75 = vsel %vm73, %v72, 0
    %77 = vmatprep.subr.mxu0 0.0
    %78 = vmatpush1.msra.mxu0 %v70
    %79 = vmatprep.subr.mxu0 0.0
    %80 = vmatpush1.msra.mxu0 0.0
    %81 = vmatprep.subr.mxu0 0.0
    %82 = vmatpush1.msra.mxu0 0.0
    %83 = vmatprep.subr.mxu0 0.0
    %84 = vmatpush1.msra.mxu0 0.0
    %85 = vmatprep.subr.mxu0 0.0
    %86 = vmatpush1.msra.mxu0 0.0
    %87 = vmatprep.subr.mxu0 0.0
    %88 = vmatpush1.msra.mxu0 0.0
    %89 = vmatprep.subr.mxu0 0.0
    %90 = vmatpush1.msra.mxu0 0.0
    %91 = vmatprep.subr.mxu0 0.0
    %92 = vmatpush1.msra.mxu0 0.0
    %93 = vmatprep.subr.mxu0 0.0
    %94 = vmatpush1.msra.mxu0 0.0
    %95 = vmatprep.subr.mxu0 0.0
    %96 = vmatpush1.msra.mxu0 0.0
    %97 = vmatprep.subr.mxu0 0.0
    %98 = vmatpush1.msra.mxu0 0.0
    %99 = vmatprep.subr.mxu0 0.0
    %100 = vmatpush1.msra.mxu0 0.0
    %101 = vmatprep.subr.mxu0 0.0
    %102 = vmatpush1.msra.mxu0 0.0
    %103 = vmatprep.subr.mxu0 0.0
    %104 = vmatpush1.msra.mxu0 0.0
    %105 = vmatprep.subr.mxu0 0.0
    %106 = vmatpush1.msra.mxu0 0.0
    %107 = vmatprep.subr.mxu0 0.0
    %108 = vmatpush1.msra.mxu0 0.0
    %109 = vmatprep.subr.mxu0 0.0
    %110 = vmatpush1.msra.mxu0 0.0
    %111 = vmatprep.subr.mxu0 0.0
    %112 = vmatpush1.msra.mxu0 0.0
    %113 = vmatprep.subr.mxu0 0.0
    %114 = vmatpush1.msra.mxu0 0.0
    %115 = vmatprep.subr.mxu0 0.0
    %116 = vmatpush1.msra.mxu0 0.0
    %117 = vmatprep.subr.mxu0 0.0
    %118 = vmatpush1.msra.mxu0 0.0
    %119 = vmatprep.subr.mxu0 0.0
    %120 = vmatpush1.msra.mxu0 0.0
    %121 = vmatprep.subr.mxu0 0.0
    %122 = vmatpush1.msra.mxu0 0.0
    %123 = vmatprep.subr.mxu0 0.0
    %124 = vmatpush1.msra.mxu0 0.0
    %125 = vmatprep.subr.mxu0 0.0
    %126 = vmatpush1.msra.mxu0 0.0
    %127 = vmatprep.subr.mxu0 0.0
    %128 = vmatpush1.msra.mxu0 0.0
    %129 = vmatprep.subr.mxu0 0.0
    %130 = vmatpush1.msra.mxu0 0.0
    %131 = vmatprep.subr.mxu0 0.0
    %132 = vmatpush1.msra.mxu0 0.0
    %133 = vmatprep.subr.mxu0 0.0
    %134 = vmatpush1.msra.mxu0 0.0
    %135 = vmatprep.subr.mxu0 0.0
    %136 = vmatpush1.msra.mxu0 0.0
    %137 = vmatprep.subr.mxu0 0.0
    %138 = vmatpush1.msra.mxu0 0.0
    %139 = vmatprep.subr.mxu0 0.0
    %140 = vmatpush1.msra.mxu0 0.0
    %141 = vmatprep.mubr.f32.mxu0 0.0
    %142 = vmatmul.mubr.f32.gmra.mrb[0].mxu0 %v75
    %v143 = vpop.f32.mrb[0].mxu0
    %v144 = vadd.f32 0.0, %v143
    %v145 = vpop.f32.mrb[0].mxu0
    %146 = vdwg.mxu0
    %v147 = vadd.f32 %v71, %v144
    %vm148 = vcmask 130048
    %149 = vst.msk [vmem:[#allocation2] sm:$0xff] %vm148, %v147
    // Predicated region
    $region42: #{tpu_custom_call.1} parent=1 // pred_check
      %p150 = pneg %p62
    $region43: #{tpu_custom_call.1} parent=1 // pred_check_branch
      %152 = sbr.rel (%p150) target = $region45
    $region44: #{tpu_custom_call.1} parent=1 // pred_region
      %v153 = vld [vmem:[#allocation2] sm:$0xff]
      %v154 = vld [vmem:[#allocation9] sm:$0xff]
      %v155 = vld [vmem:[#allocation9 + $0x8] sm:$0xff]
      %v156 = vld [vmem:[%s3] sm:$0x1]
      %v158 = vlaneseq
      %v159 = vshrl.u32 %v158, 7
      %v160 = vsub.s32 0, %v159
      %v161 = vrot.slane %v156, %v160
      %v164 = vsel %vm148, %v153, 0
      %166 = vmatprep.subr.mxu0 0.0
      %167 = vmatpush1.msra.mxu0 %v154
      %168 = vmatprep.subr.mxu0 0.0
      %169 = vmatpush1.msra.mxu0 %v155
      %170 = vmatprep.subr.mxu0 0.0
      %171 = vmatpush1.msra.mxu0 0.0
      %172 = vmatprep.subr.mxu0 0.0
      %173 = vmatpush1.msra.mxu0 0.0
      %174 = vmatprep.subr.mxu0 0.0
      %175 = vmatpush1.msra.mxu0 0.0
      %176 = vmatprep.subr.mxu0 0.0
      %177 = vmatpush1.msra.mxu0 0.0
      %178 = vmatprep.subr.mxu0 0.0
      %179 = vmatpush1.msra.mxu0 0.0
      %180 = vmatprep.subr.mxu0 0.0
      %181 = vmatpush1.msra.mxu0 0.0
      %182 = vmatprep.subr.mxu0 0.0
      %183 = vmatpush1.msra.mxu0 0.0
      %184 = vmatprep.subr.mxu0 0.0
      %185 = vmatpush1.msra.mxu0 0.0
      %186 = vmatprep.subr.mxu0 0.0
      %187 = vmatpush1.msra.mxu0 0.0
      %188 = vmatprep.subr.mxu0 0.0
      %189 = vmatpush1.msra.mxu0 0.0
      %190 = vmatprep.subr.mxu0 0.0
      %191 = vmatpush1.msra.mxu0 0.0
      %192 = vmatprep.subr.mxu0 0.0
      %193 = vmatpush1.msra.mxu0 0.0
      %194 = vmatprep.subr.mxu0 0.0
      %195 = vmatpush1.msra.mxu0 0.0
      %196 = vmatprep.subr.mxu0 0.0
      %197 = vmatpush1.msra.mxu0 0.0
      %198 = vmatprep.subr.mxu0 0.0
      %199 = vmatpush1.msra.mxu0 0.0
      %200 = vmatprep.subr.mxu0 0.0
      %201 = vmatpush1.msra.mxu0 0.0
      %202 = vmatprep.subr.mxu0 0.0
      %203 = vmatpush1.msra.mxu0 0.0
      %204 = vmatprep.subr.mxu0 0.0
      %205 = vmatpush1.msra.mxu0 0.0
      %206 = vmatprep.subr.mxu0 0.0
      %207 = vmatpush1.msra.mxu0 0.0
      %208 = vmatprep.subr.mxu0 0.0
      %209 = vmatpush1.msra.mxu0 0.0
      %210 = vmatprep.subr.mxu0 0.0
      %211 = vmatpush1.msra.mxu0 0.0
      %212 = vmatprep.subr.mxu0 0.0
      %213 = vmatpush1.msra.mxu0 0.0
      %214 = vmatprep.subr.mxu0 0.0
      %215 = vmatpush1.msra.mxu0 0.0
      %216 = vmatprep.subr.mxu0 0.0
      %217 = vmatpush1.msra.mxu0 0.0
      %218 = vmatprep.subr.mxu0 0.0
      %219 = vmatpush1.msra.mxu0 0.0
      %220 = vmatprep.subr.mxu0 0.0
      %221 = vmatpush1.msra.mxu0 0.0
      %222 = vmatprep.subr.mxu0 0.0
      %223 = vmatpush1.msra.mxu0 0.0
      %224 = vmatprep.subr.mxu0 0.0
      %225 = vmatpush1.msra.mxu0 0.0
      %226 = vmatprep.subr.mxu0 0.0
      %227 = vmatpush1.msra.mxu0 0.0
      %228 = vmatprep.subr.mxu0 0.0
      %229 = vmatpush1.msra.mxu0 0.0
      %230 = vmatprep.mubr.f32.mxu0 0.0
      %231 = vmatmul.mubr.f32.gmra.mrb[0].mxu0 %v164
      %v232 = vpop.f32.mrb[0].mxu0
      %v233 = vadd.f32 %v161, %v232
      %v234 = vpop.f32.mrb[0].mxu0
      %235 = vdwg.mxu0
      %v236 = vmax.f32 %v233, 0.0
      %v237 = vld [vmem:[%s4] sm:$0x1]
      %s238 = sld [smem:[#allocation3]]
      %v239 = vstv %s238
      %vm240 = vcmask 261120
      %v242 = vsel %vm240, %v237, 0
      %v245 = vsel %vm240, %v236, 0
      %247 = vmatprep.subr.mxu0 0.0
      %248 = vmatpush1.xpose.msra.mxu0 %v245
      %249 = vmatprep.subr.mxu0 0.0
      %250 = vmatpush1.xpose.msra.mxu0 0.0
      %251 = vmatprep.subr.mxu0 0.0
      %252 = vmatpush1.xpose.msra.mxu0 0.0
      %253 = vmatprep.subr.mxu0 0.0
      %254 = vmatpush1.xpose.msra.mxu0 0.0
      %255 = vmatprep.subr.mxu0 0.0
      %256 = vmatpush1.xpose.msra.mxu0 0.0
      %257 = vmatprep.subr.mxu0 0.0
      %258 = vmatpush1.xpose.msra.mxu0 0.0
      %259 = vmatprep.subr.mxu0 0.0
      %260 = vmatpush1.xpose.msra.mxu0 0.0
      %261 = vmatprep.subr.mxu0 0.0
      %262 = vmatpush1.xpose.msra.mxu0 0.0
      %263 = vmatprep.subr.mxu0 0.0
      %264 = vmatpush1.xpose.msra.mxu0 0.0
      %265 = vmatprep.subr.mxu0 0.0
      %266 = vmatpush1.xpose.msra.mxu0 0.0
      %267 = vmatprep.subr.mxu0 0.0
      %268 = vmatpush1.xpose.msra.mxu0 0.0
      %269 = vmatprep.subr.mxu0 0.0
      %270 = vmatpush1.xpose.msra.mxu0 0.0
      %271 = vmatprep.subr.mxu0 0.0
      %272 = vmatpush1.xpose.msra.mxu0 0.0
      %273 = vmatprep.subr.mxu0 0.0
      %274 = vmatpush1.xpose.msra.mxu0 0.0
      %275 = vmatprep.subr.mxu0 0.0
      %276 = vmatpush1.xpose.msra.mxu0 0.0
      %277 = vmatprep.subr.mxu0 0.0
      %278 = vmatpush1.xpose.msra.mxu0 0.0
      %279 = vmatprep.subr.mxu0 0.0
      %280 = vmatpush1.xpose.msra.mxu0 0.0
      %281 = vmatprep.subr.mxu0 0.0
      %282 = vmatpush1.xpose.msra.mxu0 0.0
      %283 = vmatprep.subr.mxu0 0.0
      %284 = vmatpush1.xpose.msra.mxu0 0.0
      %285 = vmatprep.subr.mxu0 0.0
      %286 = vmatpush1.xpose.msra.mxu0 0.0
      %287 = vmatprep.subr.mxu0 0.0
      %288 = vmatpush1.xpose.msra.mxu0 0.0
      %289 = vmatprep.subr.mxu0 0.0
      %290 = vmatpush1.xpose.msra.mxu0 0.0
      %291 = vmatprep.subr.mxu0 0.0
      %292 = vmatpush1.xpose.msra.mxu0 0.0
      %293 = vmatprep.subr.mxu0 0.0
      %294 = vmatpush1.xpose.msra.mxu0 0.0
      %295 = vmatprep.subr.mxu0 0.0
      %296 = vmatpush1.xpose.msra.mxu0 0.0
      %297 = vmatprep.subr.mxu0 0.0
      %298 = vmatpush1.xpose.msra.mxu0 0.0
      %299 = vmatprep.subr.mxu0 0.0
      %300 = vmatpush1.xpose.msra.mxu0 0.0
      %301 = vmatprep.subr.mxu0 0.0
      %302 = vmatpush1.xpose.msra.mxu0 0.0
      %303 = vmatprep.subr.mxu0 0.0
      %304 = vmatpush1.xpose.msra.mxu0 0.0
      %305 = vmatprep.subr.mxu0 0.0
      %306 = vmatpush1.xpose.msra.mxu0 0.0
      %307 = vmatprep.subr.mxu0 0.0
      %308 = vmatpush1.xpose.msra.mxu0 0.0
      %309 = vmatprep.subr.mxu0 0.0
      %310 = vmatpush1.xpose.msra.mxu0 0.0
      %311 = vmatprep.mubr.f32.mxu0 0.0
      %312 = vmatmul.mubr.f32.gmra.mrb[0].mxu0 %v242
      %v313 = vpop.f32.mrb[0].mxu0
      %v314 = vadd.f32 %v239, %v313
      %v315 = vpop.f32.mrb[0].mxu0
      %316 = vdwg.mxu0
      %vm317 = vcmask 57344
      %318 = vst.msk [vmem:[#allocation10] sm:$0x1] %vm317, %v314
    $region45: #{tpu_custom_call.1} parent=1 // pred_fallthru
      _
    // Predicated region
    $region46: #{tpu_custom_call.1} parent=1 // pred_check
      _
    $region47: #{tpu_custom_call.1} parent=1 // pred_check_branch
      %320 = sbr.rel (0) target = $region49
    $region48: #{tpu_custom_call.1} parent=1 // pred_region
      %s322 = ssub.s32 16, 16
      %323 = vsyncadd [#allocation6], %s322
      %s325 = sshll.u32 [#allocation10], 4
      %s326 = int_to_ptr.vmem [resolvable:$true] %s325
      %328 = dma.vmem_to_hbm [thread:$0]  %s326, 16, %s6, [#allocation6]
    $region49: #{tpu_custom_call.1} parent=1 // pred_fallthru
      _
    // Predicated region
    $region50: #{tpu_custom_call.1} parent=1 // pred_check
      _
    $region51: #{tpu_custom_call.1} parent=1 // pred_check_branch
      %330 = sbr.rel (0) target = $region53
    $region52: #{tpu_custom_call.1} parent=1 // pred_region
      %331 = dma.done [#allocation6], 16
    $region53: #{tpu_custom_call.1} parent=1 // pred_fallthru
      _
    %332 = vsyncpa [#allocation5], 1
    %333 = vsyncpa [#allocation8], 1
    %334 = vsyncpa [#allocation6], 1

</llo_original>
